<compile_context>
chip_gen: v7x
topology: tpu7x:2x2x1
jax: 0.10.0
libtpu: 0.0.40
codegen_flags: <defaults>
</compile_context>

<pallas_src>
import jax
import jax.numpy as jnp
from jax.experimental import pallas as pl
from jax.experimental.pallas import tpu as pltpu

_PH = jax.lax.Precision.HIGHEST          # used only by the pure-JAX reference
_VMEM_LIMIT = 32 * 1024 * 1024           # raise together with the tile sizes


def _tile_and_pad(n, max_tile):
    """Pick a tile size and padded extent for a point axis.

    If n fits in a single block we use the full (unpadded) extent; otherwise we
    use `max_tile` (a multiple of 128, keeping blocks (8,128)-aligned) and pad
    n up to a multiple of it.
    """
    if n <= max_tile:
        return n, n
    assert max_tile % 128 == 0
    n_pad = ((n + max_tile - 1) // max_tile) * max_tile
    return max_tile, n_pad


# ----------------------------------------------------------------------------
# Kernel 1: pairwise squared distance (diff-based, masked), 2-D tiled
# ----------------------------------------------------------------------------
def _sqdist_kernel(x_ref, yt_ref, d_ref):
    # x_ref: (ti, 3) row tile, yt_ref: (3, tj) column tile, d_ref: (ti, tj)
    acc = jnp.zeros(d_ref.shape, jnp.float32)
    for d in range(3):                                   # unrolled over coords
        diff = x_ref[:, d:d + 1] - yt_ref[d:d + 1, :]    # (ti,1)-(1,tj) -> (ti,tj)
        acc = acc + diff * diff
    # fused self/duplicate masking (matches `dist[dist < 1e-8] = inf`);
    # diff-based form gives an exact-zero diagonal (no cancellation issues)
    d_ref[...] = jnp.where(acc < 1e-8, jnp.inf, acc)


def square_distance_pallas(xyz, *, max_tile=512):
    # 512x512 f32 out block = 1 MiB (2 MiB double-buffered): safe on v5e/v6e/v7x.
    # On v6e this can be raised to 1024 together with _VMEM_LIMIT; keep <=512
    # on v7x (64 MiB physical VMEM).
    BS, N, _ = xyz.shape
    xyz = xyz.astype(jnp.float32)
    ti, n_pad = _tile_and_pad(N, max_tile)
    tj = ti
    xyz_p = jnp.pad(xyz, ((0, 0), (0, n_pad - N), (0, 0))) if n_pad != N else xyz
    xyz_t = jnp.transpose(xyz_p, (0, 2, 1))              # tiny [BS, 3, n_pad]
    dist = pl.pallas_call(
        _sqdist_kernel,
        out_shape=jax.ShapeDtypeStruct((BS, n_pad, n_pad), jnp.float32),
        grid=(BS, n_pad // ti, n_pad // tj),
        in_specs=[pl.BlockSpec((None, ti, 3), lambda b, i, j: (b, i, 0)),
                  pl.BlockSpec((None, 3, tj), lambda b, i, j: (b, 0, j))],
        out_specs=pl.BlockSpec((None, ti, tj), lambda b, i, j: (b, i, j)),
        compiler_params=pltpu.CompilerParams(
            dimension_semantics=("parallel", "parallel", "parallel"),
            vmem_limit_bytes=_VMEM_LIMIT),
    )(xyz_p, xyz_t)
    return dist[:, :N, :N] if n_pad != N else dist


# ----------------------------------------------------------------------------
# Kernel 2: fused interp MLP + bmm + Conv1d(kernel_size=K), points-in-lane
# ----------------------------------------------------------------------------
def _fused_interp_conv_kernel(rel_ref, ld_ref, w1_ref, b1_ref, w2_ref, b2_ref,
                              wck_ref, bc_ref, out_ref):
    # Points-in-lane layout (lane-dense loads/stores):
    #   rel_ref : (L, 3, tp)    relative xyz per neighbor
    #   ld_ref  : (L, C, tp)    gathered neighbor features
    #   w1_ref  : (H, 3)        Linear(3,H) with eval-BN scale folded in
    #   b1_ref  : (H, 1)        folded bias
    #   w2_ref  : (K, H), b2_ref: (K, 1)
    #   wck_ref : (K, C_out, C) Conv1d weight regrouped per tap k
    #   bc_ref  : (C_out, 1)
    #   out_ref : (C_out, tp)
    L, _, tp = rel_ref.shape
    C = ld_ref.shape[1]
    K = w2_ref.shape[0]
    C_out = out_ref.shape[0]

    w1 = w1_ref[...]
    w2 = w2_ref[...]
    # hoist the (.,1) -> (., tp) lane broadcasts out of the neighbor loop
    b1 = jnp.broadcast_to(b1_ref[...], (w1.shape[0], tp))
    b2 = jnp.broadcast_to(b2_ref[...], (K, tp))

    # per-tap accumulators: acc[k][c, p] = sum_l ldata[l, c, p] * alpha[l, k, p]
    acc = [jnp.zeros((C, tp), jnp.float32) for _ in range(K)]

    for l in range(L):                                   # static unroll, L small
        rel_l = rel_ref[l]                               # (3, tp)
        # interp MLP (default-precision MXU passes, f32 accumulation)
        h = jnp.dot(w1, rel_l, preferred_element_type=jnp.float32) + b1
        h = jnp.maximum(h, 0.0)                          # ReLU (BN already folded)
        logits = jnp.dot(w2, h, preferred_element_type=jnp.float32) + b2
        logits = logits - jnp.max(logits, axis=0, keepdims=True)
        e = jnp.exp(logits)
        inv = pl.reciprocal(jnp.sum(e, axis=0, keepdims=True), approx=True)
        alpha = e * inv                                  # (K, tp), stays in VMEM

        d_l = ld_ref[l]                                  # (C, tp)
        for k in range(K):                               # pure-VPU sublane-row
            acc[k] = acc[k] + d_l * alpha[k:k + 1, :]    # broadcast, no concats

    # Conv1d(kernel_size=K): out[o,p] = sum_k sum_c wconv[o,c,k] * acc[k][c,p]
    out = jnp.broadcast_to(bc_ref[...], (C_out, tp))
    for k in range(K):
        out = out + jnp.dot(wck_ref[k], acc[k], preferred_element_type=jnp.float32)
    out_ref[...] = out.astype(out_ref.dtype)


def fused_interp_conv_pallas(rel_t, local_data_t, params, *, max_tile=256):
    # max_tile=256 matches the 256-wide MXU on v6e/v7x; use 128 on v5e.  On v7x
    # also prefer a smaller tp if BS*N/tp would leave one TensorCore idle.
    BS, L, _, N = rel_t.shape
    C = local_data_t.shape[2]
    H = params["w1f"].shape[0]
    K = params["w2t"].shape[0]
    C_out = params["bcc"].shape[0]
    tp, n_pad = _tile_and_pad(N, max_tile)
    if n_pad != N:
        pad = ((0, 0), (0, 0), (0, 0), (0, n_pad - N))
        rel_t = jnp.pad(rel_t, pad)
        local_data_t = jnp.pad(local_data_t, pad)

    full2 = lambda b, i: (0, 0)
    full3 = lambda b, i: (0, 0, 0)

    out_t = pl.pallas_call(
        _fused_interp_conv_kernel,
        out_shape=jax.ShapeDtypeStruct((BS, C_out, n_pad), jnp.float32),
        grid=(BS, n_pad // tp),
        in_specs=[
            pl.BlockSpec((None, L, 3, tp), lambda b, i: (b, 0, 0, i)),
            pl.BlockSpec((None, L, C, tp), lambda b, i: (b, 0, 0, i)),
            pl.BlockSpec((H, 3), full2),
            pl.BlockSpec((H, 1), full2),
            pl.BlockSpec((K, H), full2),
            pl.BlockSpec((K, 1), full2),
            pl.BlockSpec((K, C_out, C), full3),
            pl.BlockSpec((C_out, 1), full2),
        ],
        out_specs=pl.BlockSpec((None, C_out, tp), lambda b, i: (b, 0, i)),
        compiler_params=pltpu.CompilerParams(
            dimension_semantics=("parallel", "parallel"),
            vmem_limit_bytes=_VMEM_LIMIT),
    )(rel_t, local_data_t, params["w1f"], params["b1f"],
      params["w2t"], params["b2c"], params["wckc"], params["bcc"])
    return out_t[:, :, :N] if n_pad != N else out_t


# ----------------------------------------------------------------------------
# Forward wrapper (glue + kernels)
# ----------------------------------------------------------------------------
def interp_conv_forward(xyz, data, params, *, kernel_size, local_size):
    BS, N, C = data.shape
    L = local_size

    # --- masked pairwise distances (Pallas) + kNN selection (XLA glue) ---
    dist = square_distance_pallas(xyz)                              # [BS,N,N], masked
    _, knn_idx = jax.lax.top_k(-dist, L - 1)                        # smallest L-1
    self_idx = jnp.broadcast_to(
        jnp.arange(N, dtype=knn_idx.dtype)[None, :, None], (BS, N, 1))
    local_index = jnp.concatenate([self_idx, knn_idx], axis=-1)     # [BS, N, L]

    # gather in neighbor-major, points-in-lane layout [BS, L, ., N] so the
    # fused kernel sees lane-dense tiles without big HBM transposes.
    idx_t = jnp.transpose(local_index, (0, 2, 1))                   # [BS, L, N] (tiny)
    data_t = jnp.transpose(data, (0, 2, 1)).astype(jnp.float32)     # [BS, C, N]
    xyz_t = jnp.transpose(xyz, (0, 2, 1)).astype(jnp.float32)       # [BS, 3, N]

    def gather_t(arr_t, idx):                                       # [D,N],[L,N]->[L,D,N]
        return jax.vmap(lambda row: arr_t[:, row])(idx)

    # TODO(synk): keep local_data in bf16 through this gather and cast to f32
    # in-register inside the kernel to halve its dominant HBM input stream.
    local_data_t = jax.vmap(gather_t)(data_t, idx_t)                # [BS, L, C, N]
    local_xyz_t = jax.vmap(gather_t)(xyz_t, idx_t)                  # [BS, L, 3, N]
    rel_t = local_xyz_t - xyz_t[:, None, :, :]                      # [BS, L, 3, N]

    # --- fused interp MLP + bmm + conv (Pallas), lane-dense output ---
    out_t = fused_interp_conv_pallas(rel_t, local_data_t, params)   # [BS, C_out, N]
    out = jnp.transpose(out_t, (0, 2, 1))                           # [BS, N, C_out]
    aux = {"local_index": local_index, "dist": dist}
    return (xyz, out), aux


# ----------------------------------------------------------------------------
# Pure-JAX reference (same local_index; original unfolded parameters)
# ----------------------------------------------------------------------------
def reference_square_distance(xyz):
    diff = xyz[:, :, None, :] - xyz[:, None, :, :]
    return jnp.sum(diff * diff, axis=-1)


def reference_forward(xyz, data, params, local_index, *, kernel_size, local_size):
    BS, N, C = data.shape
    L, K = local_size, kernel_size
    gather = jax.vmap(lambda arr, idx: arr[idx])
    local_data = gather(data, local_index)                          # [BS, N, L, C]
    local_xyz = gather(xyz, local_index)
    rel = (local_xyz - xyz[:, :, None, :]).reshape(-1, 3)
    h = jnp.dot(rel, params["w1t"].T, precision=_PH) + params["b1"]
    h = (h - params["bn_mean"]) / jnp.sqrt(params["bn_var"] + 1e-5)
    h = h * params["bn_gamma"] + params["bn_beta"]                  # eval BatchNorm1d
    h = jnp.maximum(h, 0.0)
    logits = jnp.dot(h, params["w2t"].T, precision=_PH) + params["b2"]
    alpha = jax.nn.softmax(logits, axis=-1).reshape(BS * N, L, K)
    ld = local_data.reshape(BS * N, L, C).transpose(0, 2, 1)        # [P, C, L]
    inter = jnp.einsum("pcl,plk->pck", ld, alpha, precision=_PH)    # bmm
    out = jnp.einsum("pck,ock->po", inter, params["wconv"],
                     precision=_PH) + params["bconv"]
    return out.reshape(BS, N, -1)


# ----------------------------------------------------------------------------
# Deterministic parameter init (synthetic; shapes from the module __init__)
# ----------------------------------------------------------------------------
def init_params(key, in_channels, out_channels, kernel_size, hidden=32):
    ks = jax.random.split(key, 10)
    w1t = 0.3 * jax.random.normal(ks[0], (hidden, 3), jnp.float32)        # Linear(3,32).weight
    b1 = 0.1 * jax.random.normal(ks[1], (hidden,), jnp.float32)
    gamma = 1.0 + 0.1 * jax.random.normal(ks[2], (hidden,), jnp.float32)  # BatchNorm1d(32)
    beta = 0.1 * jax.random.normal(ks[3], (hidden,), jnp.float32)
    mean = 0.1 * jax.random.normal(ks[4], (hidden,), jnp.float32)
    var = jax.random.uniform(ks[5], (hidden,), jnp.float32, 0.5, 1.5)
    w2t = 0.3 * jax.random.normal(ks[6], (kernel_size, hidden), jnp.float32)  # Linear(32,K).weight
    b2 = 0.1 * jax.random.normal(ks[7], (kernel_size,), jnp.float32)
    wconv = 0.3 * jax.random.normal(
        ks[8], (out_channels, in_channels, kernel_size), jnp.float32)     # Conv1d weight
    bconv = 0.1 * jax.random.normal(ks[9], (out_channels,), jnp.float32)

    # eval-mode BatchNorm folded into the first Linear (kernel-2 inputs)
    eps = 1e-5
    inv_std = gamma / jnp.sqrt(var + eps)
    w1f = w1t * inv_std[:, None]                                          # (H, 3)
    b1f = ((b1 - mean) * inv_std + beta)[:, None]                         # (H, 1)
    # Conv1d weight regrouped per tap: wckc[k, o, c] = wconv[o, c, k]
    wckc = jnp.transpose(wconv, (2, 0, 1))                                # (K, C_out, C)
    return dict(
        # original module parameters (used by the pure-JAX reference)
        w1t=w1t, b1=b1, bn_gamma=gamma, bn_beta=beta, bn_mean=mean, bn_var=var,
        w2t=w2t, b2=b2, wconv=wconv, bconv=bconv,
        # folded / regrouped parameters consumed by the Pallas kernel
        w1f=w1f, b1f=b1f, b2c=b2[:, None], wckc=wckc, bcc=bconv[:, None])


if __name__ == "__main__":
    key = jax.random.PRNGKey(0)
    BS, N = 2, 16
    in_channels, out_channels = 4, 8
    kernel_size, local_size = 4, 8

    kx, kd, kp = jax.random.split(key, 3)
    xyz = jax.random.uniform(kx, (BS, N, 3), jnp.float32)
    data = jax.random.normal(kd, (BS, N, in_channels), jnp.float32)
    params = init_params(kp, in_channels, out_channels, kernel_size)

    (xyz_out, out), aux = interp_conv_forward(
        xyz, data, params, kernel_size=kernel_size, local_size=local_size)
    out = jax.block_until_ready(out)

    # --- validation against pure-JAX reference ---
    dist_ref = reference_square_distance(xyz)
    dist_ref = jnp.where(dist_ref < 1e-8, jnp.inf, dist_ref)   # same fused masking
    assert jnp.allclose(aux["dist"], dist_ref, atol=1e-4, rtol=1e-4), \
        "distance kernel mismatch"

    out_ref = reference_forward(xyz, data, params, aux["local_index"],
                                kernel_size=kernel_size, local_size=local_size)
    assert out.shape == (BS, N, out_channels)
    # kernel uses default-precision MXU (bf16 passes, f32 accumulate) + approx
    # reciprocal; reference uses HIGHEST -> modest tolerance.
    assert jnp.allclose(out, out_ref, atol=2.5e-2, rtol=2.5e-2), \
        "forward output mismatch"

    print("KERNEL_OK")
</pallas_src>

<mosaic_0001>
module attributes {stable_mosaic.version = 11 : i64} {
  func.func @_sqdist_kernel(%arg0: i32, %arg1: i32, %arg2: i32, %arg3: memref<1x16x3xf32, #tpu.memory_space<vmem>>, %arg4: memref<1x3x16xf32, #tpu.memory_space<vmem>>, %arg5: memref<1x16x16xf32, #tpu.memory_space<vmem>>) attributes {dimension_semantics = [#tpu.dimension_semantics<parallel>, #tpu.dimension_semantics<parallel>, #tpu.dimension_semantics<parallel>], iteration_bounds = array<i64: 2, 1, 1>, scalar_prefetch = 0 : i64, scratch_operands = 0 : i64, tpu.core_type = #tpu.core_type<tc>, window_params = [{transform_indices = @transform_0, window_bounds = array<i64: 1, 16, 3>}, {transform_indices = @transform_1, window_bounds = array<i64: 1, 3, 16>}, {transform_indices = @transform_2, window_bounds = array<i64: 1, 16, 16>}]} {
    %cst = arith.constant 0.000000e+00 : f32
    %0 = vector.broadcast %cst : f32 to vector<16x16xf32>
    %c0 = arith.constant 0 : index
    %c0_0 = arith.constant 0 : index
    %c0_1 = arith.constant 0 : index
    %1 = vector.load %arg3[%c0, %c0_0, %c0_1] : memref<1x16x3xf32, #tpu.memory_space<vmem>>, vector<1x16x1xf32>
    %2 = vector.shape_cast %1 : vector<1x16x1xf32> to vector<16x1xf32>
    %c0_2 = arith.constant 0 : index
    %c0_3 = arith.constant 0 : index
    %c0_4 = arith.constant 0 : index
    %3 = vector.load %arg4[%c0_2, %c0_3, %c0_4] : memref<1x3x16xf32, #tpu.memory_space<vmem>>, vector<1x1x16xf32>
    %4 = vector.shape_cast %3 : vector<1x1x16xf32> to vector<1x16xf32>
    %5 = vector.broadcast %2 : vector<16x1xf32> to vector<16x16xf32>
    %6 = vector.broadcast %4 : vector<1x16xf32> to vector<16x16xf32>
    %7 = arith.subf %5, %6 : vector<16x16xf32>
    %8 = arith.mulf %7, %7 : vector<16x16xf32>
    %9 = arith.addf %0, %8 : vector<16x16xf32>
    %c0_5 = arith.constant 0 : index
    %c0_6 = arith.constant 0 : index
    %c1 = arith.constant 1 : index
    %10 = vector.load %arg3[%c0_5, %c0_6, %c1] : memref<1x16x3xf32, #tpu.memory_space<vmem>>, vector<1x16x1xf32>
    %11 = vector.shape_cast %10 : vector<1x16x1xf32> to vector<16x1xf32>
    %c0_7 = arith.constant 0 : index
    %c1_8 = arith.constant 1 : index
    %c0_9 = arith.constant 0 : index
    %12 = vector.load %arg4[%c0_7, %c1_8, %c0_9] : memref<1x3x16xf32, #tpu.memory_space<vmem>>, vector<1x1x16xf32>
    %13 = vector.shape_cast %12 : vector<1x1x16xf32> to vector<1x16xf32>
    %14 = vector.broadcast %11 : vector<16x1xf32> to vector<16x16xf32>
    %15 = vector.broadcast %13 : vector<1x16xf32> to vector<16x16xf32>
    %16 = arith.subf %14, %15 : vector<16x16xf32>
    %17 = arith.mulf %16, %16 : vector<16x16xf32>
    %18 = arith.addf %9, %17 : vector<16x16xf32>
    %c0_10 = arith.constant 0 : index
    %c0_11 = arith.constant 0 : index
    %c2 = arith.constant 2 : index
    %19 = vector.load %arg3[%c0_10, %c0_11, %c2] : memref<1x16x3xf32, #tpu.memory_space<vmem>>, vector<1x16x1xf32>
    %20 = vector.shape_cast %19 : vector<1x16x1xf32> to vector<16x1xf32>
    %c0_12 = arith.constant 0 : index
    %c2_13 = arith.constant 2 : index
    %c0_14 = arith.constant 0 : index
    %21 = vector.load %arg4[%c0_12, %c2_13, %c0_14] : memref<1x3x16xf32, #tpu.memory_space<vmem>>, vector<1x1x16xf32>
    %22 = vector.shape_cast %21 : vector<1x1x16xf32> to vector<1x16xf32>
    %23 = vector.broadcast %20 : vector<16x1xf32> to vector<16x16xf32>
    %24 = vector.broadcast %22 : vector<1x16xf32> to vector<16x16xf32>
    %25 = arith.subf %23, %24 : vector<16x16xf32>
    %26 = arith.mulf %25, %25 : vector<16x16xf32>
    %27 = arith.addf %18, %26 : vector<16x16xf32>
    %cst_15 = arith.constant 9.99999993E-9 : f32
    %28 = vector.broadcast %cst_15 : f32 to vector<16x16xf32>
    %29 = arith.cmpf olt, %27, %28 : vector<16x16xf32>
    %cst_16 = arith.constant 0x7F800000 : f32
    %30 = vector.broadcast %cst_16 : f32 to vector<16x16xf32>
    %31 = arith.select %29, %30, %27 : vector<16x16xi1>, vector<16x16xf32>
    %c0_17 = arith.constant 0 : index
    %c0_18 = arith.constant 0 : index
    %c0_19 = arith.constant 0 : index
    %32 = vector.load %arg5[%c0_17, %c0_18, %c0_19] : memref<1x16x16xf32, #tpu.memory_space<vmem>>, vector<1x16x16xf32>
    %33 = vector.shape_cast %32 : vector<1x16x16xf32> to vector<16x16xf32>
    %34 = vector.shape_cast %31 : vector<16x16xf32> to vector<1x16x16xf32>
    tpu.vector_store %arg5[%c0_17, %c0_18, %c0_19], %34 {strides = array<i32>} : memref<1x16x16xf32, #tpu.memory_space<vmem>>, vector<1x16x16xf32>,
    return
  }
  func.func @transform_0(%arg0: i32, %arg1: i32, %arg2: i32) -> (i32, i32, i32) {
    %c0_i32 = arith.constant 0 : i32
    %c0_i32_0 = arith.constant 0 : i32
    return %arg0, %arg1, %c0_i32 : i32, i32, i32
  }
  func.func @transform_1(%arg0: i32, %arg1: i32, %arg2: i32) -> (i32, i32, i32) {
    %c0_i32 = arith.constant 0 : i32
    %c0_i32_0 = arith.constant 0 : i32
    return %arg0, %c0_i32, %arg2 : i32, i32, i32
  }
  func.func @transform_2(%arg0: i32, %arg1: i32, %arg2: i32) -> (i32, i32, i32) {
    %c0_i32 = arith.constant 0 : i32
    return %arg0, %arg1, %arg2 : i32, i32, i32
  }
}

</mosaic_0001>

<llo_original>
// kernel: tpu_custom_call.1
$region0: #{tpu_custom_call.1}
  #allocation0 [shape = 'u32[]', space=smem, size = 0x4, offset = 0x4, fixed_abs, tag = 'smem constant byte address 0x4 - core index']
  #allocation1 [shape = 'u32[144,128]{1,0:T(1,128)}', space=vmem, size = 0x12000, scoped, tag = 'internal scratch']
  %s0 = inlined_call_operand.vmem [shape: f32[2,16,3], index: 0, kind: input, shape index: {}]
  %s1 = inlined_call_operand.vmem [shape: f32[2,3,16], index: 1, kind: input, shape index: {}]
  %s2 = inlined_call_operand.hbm [shape: f32[2,16,16], index: 2, kind: output, shape index: {}]
  %s3 = sld [smem:[#allocation0]]
  $region41: #{tpu_custom_call.1} parent=0
    _
  %s5 = ssub.s32 1, %s3
  %s6 = scalar_select 0, %s5, %s3
  $region1: #{tpu_custom_call.1} parent=0
    #allocation2 [shape = 'u8[16384]{0}', space=vmem, size = 0x4000, scoped, tag = 'output window, operand 0']
    #allocation3 [shape = 's32[2]{0}', space=sflag, size = 0x8, scoped, tag = 'scoped memory for tpu_custom_call.1']
    %7 = vsyncpa [#allocation3], 0
    %s8 = scalar_lea.sflag [#allocation3], 1
    %9 = vsyncpa %s8, 0
    loop: start=0, step=1, limit=4
    $region2: #{tpu_custom_call.1} parent=1 // loop_pre_header
      _
    $region3: #{tpu_custom_call.1} parent=1 // loop_header
      %s11 = sphi 0, %s15
      %p12 = scmp.ge.s32.totalorder %s11, 4
      %s18 = sphi 0, %s37
      %s19 = sphi 0, %s33
      %s20 = sphi 0, %s29
      %s21 = sphi 0, %s18
      %s22 = sphi 0, %s19
      %s23 = sphi 0, %s20
      %s24 = sphi 0, %s21
      %s25 = sphi 0, %s22
      %s26 = sphi 0, %s23
      %s42 = sphi 0, %s44
      %s45 = sphi 0, %s42
      %s46 = sphi 0, %s45
      %s62 = sphi 0, %s46
      %s70 = sphi 0, %s72
      %s73 = sphi 0, %s70
      %s74 = sphi 0, %s73
      %s90 = sphi 0, %s74
      %s100 = sphi 0, %s102
      %s103 = sphi 0, %s100
      %s104 = sphi 0, %s103
      %s120 = sphi 0, %s104
    $region4: #{tpu_custom_call.1} parent=1 // loop_header_branch
      %14 = sbr.rel (%p12) target = $region8
    $region5: #{tpu_custom_call.1} parent=1 // loop_body
      %s16 = ssub.s32 %s11, 1
      %s17 = ssub.s32 %s11, 2
      %s27 = sadd.s32 1, %s20
      %p28 = scmp.ge.s32.totalorder %s27, 1
      %s29 = scalar_select %p28, 0, %s27
      %s30 = sadd.s32 1, %s19
      %s31 = scalar_select %p28, %s30, %s19
      %p32 = scmp.ge.s32.totalorder %s31, 1
      %s33 = scalar_select %p32, 0, %s31
      %s34 = sadd.s32 1, %s18
      %s35 = scalar_select %p32, %s34, %s18
      %p36 = scmp.ge.s32.totalorder %s35, 2
      %s37 = scalar_select %p36, 0, %s35
      %s38 = ssub.s32 %s18, %s37
      %s39 = ssub.s32 %s19, %s33
      %s40 = sor.u32 %s38, %s39
      %p41 = scmp.eq.s32.totalorder %s40, 0
      %s43 = sadd.s32 %s42, 1
      %s44 = scalar_select %p41, %s42, %s43
      %p47 = pneg %p41
      %p48 = scmp.eq.s32.totalorder %s11, 1
      %p49 = por %p47, %p48
      %p50 = scmp.ne.s32.totalorder %s42, %s45
      %p51 = scmp.eq.s32.totalorder %s11, 0
      %p52 = por %p50, %p51
      %p53 = scmp.ne.s32.totalorder %s42, %s45
      %p54 = scmp.eq.s32.totalorder %s16, 1
      %p55 = por %p53, %p54
      %p56 = scmp.ne.s32.totalorder %s45, %s46
      %p57 = scmp.eq.s32.totalorder %s16, 0
      %p58 = por %p56, %p57
      %p59 = scmp.ne.s32.totalorder %s45, %s46
      %p60 = scmp.eq.s32.totalorder %s17, 1
      %p61 = por %p59, %p60
      %p63 = scmp.ne.s32.totalorder %s46, %s62
      %p64 = scmp.eq.s32.totalorder %s17, 0
      %p65 = por %p63, %p64
      %s66 = ssub.s32 %s18, %s37
      %s67 = ssub.s32 %s20, %s29
      %s68 = sor.u32 %s66, %s67
      %p69 = scmp.eq.s32.totalorder %s68, 0
      %s71 = sadd.s32 %s70, 1
      %s72 = scalar_select %p69, %s70, %s71
      %p75 = pneg %p69
      %p76 = scmp.eq.s32.totalorder %s11, 1
      %p77 = por %p75, %p76
      %p78 = scmp.ne.s32.totalorder %s70, %s73
      %p79 = scmp.eq.s32.totalorder %s11, 0
      %p80 = por %p78, %p79
      %p81 = scmp.ne.s32.totalorder %s70, %s73
      %p82 = scmp.eq.s32.totalorder %s16, 1
      %p83 = por %p81, %p82
      %p84 = scmp.ne.s32.totalorder %s73, %s74
      %p85 = scmp.eq.s32.totalorder %s16, 0
      %p86 = por %p84, %p85
      %p87 = scmp.ne.s32.totalorder %s73, %s74
      %p88 = scmp.eq.s32.totalorder %s17, 1
      %p89 = por %p87, %p88
      %p91 = scmp.ne.s32.totalorder %s74, %s90
      %p92 = scmp.eq.s32.totalorder %s17, 0
      %p93 = por %p91, %p92
      %s94 = ssub.s32 %s18, %s37
      %s95 = ssub.s32 %s19, %s33
      %s96 = sor.u32 %s94, %s95
      %s97 = ssub.s32 %s20, %s29
      %s98 = sor.u32 %s96, %s97
      %p99 = scmp.eq.s32.totalorder %s98, 0
      %s101 = sadd.s32 %s100, 1
      %s102 = scalar_select %p99, %s100, %s101
      %p105 = pneg %p99
      %p106 = scmp.eq.s32.totalorder %s11, 1
      %p107 = por %p105, %p106
      %p108 = scmp.ne.s32.totalorder %s100, %s103
      %p109 = scmp.eq.s32.totalorder %s11, 0
      %p110 = por %p108, %p109
      %p111 = scmp.ne.s32.totalorder %s100, %s103
      %p112 = scmp.eq.s32.totalorder %s16, 1
      %p113 = por %p111, %p112
      %p114 = scmp.ne.s32.totalorder %s103, %s104
      %p115 = scmp.eq.s32.totalorder %s16, 0
      %p116 = por %p114, %p115
      %p117 = scmp.ne.s32.totalorder %s103, %s104
      %p118 = scmp.eq.s32.totalorder %s17, 1
      %p119 = por %p117, %p118
      %p121 = scmp.ne.s32.totalorder %s104, %s120
      %p122 = scmp.eq.s32.totalorder %s17, 0
      %p123 = por %p121, %p122
      %p124 = scmp.le.s32.totalorder 1, %s11
      %p125 = scmp.lt.s32.totalorder %s11, 3
      %p126 = pnand %p124, %p125
      %p127 = pneg %p126
      // Predicated region
      $region9: #{tpu_custom_call.1} parent=5 // pred_check
        _
      $region10: #{tpu_custom_call.1} parent=5 // pred_check_branch
        %129 = sbr.rel (%p126) target = $region12
      $region11: #{tpu_custom_call.1} parent=5 // pred_region
        %s130 = ssub.s32 %s11, 1
      $region12: #{tpu_custom_call.1} parent=5 // pred_fallthru
        _
      %p131 = scmp.lt.s32.totalorder %s11, 2
      // Predicated region
      $region13: #{tpu_custom_call.1} parent=5 // pred_check
        %p132 = pneg %p131
      $region14: #{tpu_custom_call.1} parent=5 // pred_check_branch
        %134 = sbr.rel (%p132) target = $region16
      $region15: #{tpu_custom_call.1} parent=5 // pred_region
        // Predicated region
        $region17: #{tpu_custom_call.1} parent=15 // pred_check
          %p135 = pneg %p52
        $region18: #{tpu_custom_call.1} parent=15 // pred_check_branch
          %137 = sbr.rel (%p135) target = $region20
        $region19: #{tpu_custom_call.1} parent=15 // pred_region
          %s138 = smul.u32 2, %s19
          %p139 = scmp.lt.s32.totalorder %s18, 1
          %s140 = scalar_select %p139, %s18, 1
          %p141 = scmp.lt.s32.totalorder %s138, 1
          %s142 = scalar_select %p141, %s138, 1
          %s143 = smul.addr %s140, 2
          %s144 = sadd.s32 %s142, %s143
          %s145 = smul.addr %s144, 8
          %s146 = scalar_lea.vmem %s0, %s145
          %s147 = smul.u32 2, %s19
        $region20: #{tpu_custom_call.1} parent=15 // pred_fallthru
          _
        // Predicated region
        $region21: #{tpu_custom_call.1} parent=15 // pred_check
          %p148 = pneg %p80
        $region22: #{tpu_custom_call.1} parent=15 // pred_check_branch
          %150 = sbr.rel (%p148) target = $region24
        $region23: #{tpu_custom_call.1} parent=15 // pred_region
          %p151 = scmp.lt.s32.totalorder %s18, 1
          %s152 = scalar_select %p151, %s18, 1
          %p153 = scmp.lt.s32.totalorder %s20, 0
          %s154 = scalar_select %p153, %s20, 0
          %s155 = sadd.s32 %s154, %s152
          %s156 = smul.addr %s155, 4
          %s157 = scalar_lea.vmem %s1, %s156
        $region24: #{tpu_custom_call.1} parent=15 // pred_fallthru
          _
      $region16: #{tpu_custom_call.1} parent=5 // pred_fallthru
        _
      %p158 = scmp.le.s32.totalorder 1, %s11
      %p159 = scmp.lt.s32.totalorder %s11, 3
      %p160 = pnand %p158, %p159
      %p161 = pneg %p160
      // Predicated region
      $region25: #{tpu_custom_call.1} parent=5 // pred_check
        _
      $region26: #{tpu_custom_call.1} parent=5 // pred_check_branch
        %163 = sbr.rel (%p160) target = $region28
      $region27: #{tpu_custom_call.1} parent=5 // pred_region
        %s164 = ssub.s32 %s11, 1
        %s165 = smul.u32 2, %s22
        %p166 = scmp.lt.s32.totalorder %s21, 1
        %s167 = scalar_select %p166, %s21, 1
        %p168 = scmp.lt.s32.totalorder %s165, 1
        %s169 = scalar_select %p168, %s165, 1
        %s170 = smul.addr %s167, 2
        %s171 = sadd.s32 %s169, %s170
        %s172 = smul.addr %s171, 8
        %s173 = scalar_lea.vmem %s0, %s172
        %p174 = pneg %p58
        %p175 = pneg %p55
        %p176 = scmp.lt.s32.totalorder %s21, 1
        %s177 = scalar_select %p176, %s21, 1
        %p178 = scmp.lt.s32.totalorder %s23, 0
        %s179 = scalar_select %p178, %s23, 0
        %s180 = sadd.s32 %s179, %s177
        %s181 = smul.addr %s180, 4
        %s182 = scalar_lea.vmem %s1, %s181
        %p183 = pneg %p86
        %p184 = pneg %p83
        %p185 = pneg %p116
        %p186 = pneg %p113
        %s187 = sand.u32 %s103, 1
        %s188 = scalar_lea.sflag [#allocation3], %s187
        %s189 = sand.u32 %s103, 1
        %s190 = smul.addr %s189, 16
        %s191 = scalar_lea.vmem [#allocation2], %s190
        %s192 = smul.u32 2, %s22
        %p193 = scmp.lt.s32.totalorder %s21, 1
        %s194 = scalar_select %p193, %s21, 1
        %p195 = scmp.lt.s32.totalorder %s192, 1
        %s196 = scalar_select %p195, %s192, 1
        %s197 = smul.addr %s194, 2
        %s198 = sadd.s32 %s196, %s197
        %s199 = smul.addr %s198, 8
        %s200 = scalar_lea.vmem %s0, %s199
        %s201 = smul.u32 2, %s22
        %p202 = scmp.lt.s32.totalorder %s21, 1
        %s203 = scalar_select %p202, %s21, 1
        %p204 = scmp.lt.s32.totalorder %s23, 0
        %s205 = scalar_select %p204, %s23, 0
        %s206 = sadd.s32 %s205, %s203
        %s207 = smul.addr %s206, 4
        %s208 = scalar_lea.vmem %s1, %s207
        %s209 = smul.u32 2, %s22
        %v210 = vld [vmem:[%s200] sm:$0xff]
        %v211 = vld [vmem:[%s200 + $0x8] sm:$0xff]
        %v212 = vld [vmem:[%s208] sm:$0x1]
        %214 = vset.pattern.permute.xlu0 0
        %215 = vperm.xlu0 %214, %v210
        %v216 = vpop.permute.xlu0 %215
        %219 = vset.pattern.permute.xlu0 0
        %220 = vperm.xlu0 %219, %v211
        %v221 = vpop.permute.xlu0 %220
        %v223 = vlaneseq
        %v224 = vshrl.u32 %v223, 7
        %v225 = vsub.s32 0, %v224
        %v226 = vrot.slane %v212, %v225
        %v227 = vsub.f32 %v216, %v226
        %v228 = vsub.f32 %v221, %v226
        %v229 = vmul.f32 %v227, %v227
        %v230 = vmul.f32 %v228, %v228
        %v231 = vadd.f32 %v229, 0.0
        %v232 = vadd.f32 %v230, 0.0
        %v233 = vld [vmem:[%s208 + $0x1] sm:$0x1]
        %234 = vset.pattern.permute.xlu0 1
        %235 = vperm.xlu0 %234, %v210
        %v236 = vpop.permute.xlu0 %235
        %238 = vset.pattern.permute.xlu0 1
        %239 = vperm.xlu0 %238, %v211
        %v240 = vpop.permute.xlu0 %239
        %v242 = vlaneseq
        %v243 = vshrl.u32 %v242, 7
        %v244 = vsub.s32 0, %v243
        %v245 = vrot.slane %v233, %v244
        %v246 = vsub.f32 %v236, %v245
        %v247 = vsub.f32 %v240, %v245
        %v248 = vmul.f32 %v246, %v246
        %v249 = vmul.f32 %v247, %v247
        %v250 = vadd.f32 %v231, %v248
        %v251 = vadd.f32 %v232, %v249
        %v252 = vld [vmem:[%s208 + $0x2] sm:$0x1]
        %253 = vset.pattern.permute.xlu0 2
        %254 = vperm.xlu0 %253, %v210
        %v255 = vpop.permute.xlu0 %254
        %257 = vset.pattern.permute.xlu0 2
        %258 = vperm.xlu0 %257, %v211
        %v259 = vpop.permute.xlu0 %258
        %v261 = vlaneseq
        %v262 = vshrl.u32 %v261, 7
        %v263 = vsub.s32 0, %v262
        %v264 = vrot.slane %v252, %v263
        %v265 = vsub.f32 %v255, %v264
        %v266 = vsub.f32 %v259, %v264
        %v267 = vmul.f32 %v265, %v265
        %v268 = vmul.f32 %v266, %v266
        %v269 = vadd.f32 %v250, %v267
        %v270 = vadd.f32 %v251, %v268
        %vm271 = vcmp.lt.f32.partialorder %v269, 1e-08
        %vm272 = vcmp.lt.f32.partialorder %v270, 1e-08
        %v273 = vsel %vm271, inf, %v269
        %v274 = vsel %vm272, inf, %v270
        %vm275 = vcmask 130048
        %276 = vst.msk [vmem:[%s191] sm:$0xff] %vm275, %v273
        %277 = vst.msk [vmem:[%s191 + $0x8] sm:$0xff] %vm275, %v274
        %s278 = sand.u32 %s103, 1
        %s279 = scalar_lea.sflag [#allocation3], %s278
        %s280 = sand.u32 %s103, 1
        %s281 = smul.addr %s280, 16
        %s282 = scalar_lea.vmem [#allocation2], %s281
        // Predicated region
        $region29: #{tpu_custom_call.1} parent=27 // pred_check
          %p283 = pneg %p113
        $region30: #{tpu_custom_call.1} parent=27 // pred_check_branch
          %285 = sbr.rel (%p283) target = $region32
        $region31: #{tpu_custom_call.1} parent=27 // pred_region
          %s286 = smul.u32 2, %s22
          %s288 = ssub.s32 256, 256
          %289 = vsyncadd %s279, %s288
          %s290 = sadd.s32 %s23, %s286
          %s291 = smul.addr %s21, 2
          %s292 = sadd.s32 %s290, %s291
          %s293 = smul.addr %s292, 128
          %s294 = scalar_lea.hbm %s2, %s293
          %s295 = sshll.u32 %s282, 4
          %s296 = int_to_ptr.vmem [resolvable:$true] %s295
          %301 = dma.vmem_to_hbm [thread:$0]  %s296, 256, %s294, %s279, 128, 128, 8
        $region32: #{tpu_custom_call.1} parent=27 // pred_fallthru
          _
      $region28: #{tpu_custom_call.1} parent=5 // pred_fallthru
        _
      %p302 = scmp.le.s32.totalorder 2, %s11
      // Predicated region
      $region33: #{tpu_custom_call.1} parent=5 // pred_check
        %p303 = pneg %p302
      $region34: #{tpu_custom_call.1} parent=5 // pred_check_branch
        %305 = sbr.rel (%p303) target = $region36
      $region35: #{tpu_custom_call.1} parent=5 // pred_region
        %s306 = ssub.s32 %s11, 2
        // Predicated region
        $region37: #{tpu_custom_call.1} parent=35 // pred_check
          %p307 = pneg %p119
        $region38: #{tpu_custom_call.1} parent=35 // pred_check_branch
          %309 = sbr.rel (%p307) target = $region40
        $region39: #{tpu_custom_call.1} parent=35 // pred_region
          %s310 = sand.u32 %s104, 1
          %s311 = scalar_lea.sflag [#allocation3], %s310
          %s312 = sand.u32 %s104, 1
          %s313 = smul.addr %s312, 16
          %s314 = scalar_lea.vmem [#allocation2], %s313
          %315 = dma.done %s311, 256
        $region40: #{tpu_custom_call.1} parent=35 // pred_fallthru
          _
      $region36: #{tpu_custom_call.1} parent=5 // pred_fallthru
        _
    $region6: #{tpu_custom_call.1} parent=1 // loop_footer
      %s15 = sadd.s32 1, %s11
    $region7: #{tpu_custom_call.1} parent=1 // loop_footer_branch
      %10 = sbr.rel target = $region3
    $region8: #{tpu_custom_call.1} parent=1 // loop_exit
      _
    %316 = vsyncpa [#allocation3], 1
    %s317 = scalar_lea.sflag [#allocation3], 1
    %318 = vsyncpa %s317, 1

</llo_original>
